<compile_context>
chip_gen: v6e
topology: v6e:2x2x1
jax: 0.10.0
libtpu: 0.0.40
codegen_flags: <defaults>
</compile_context>

<pallas_src>
import jax
import jax.numpy as jnp
from jax import lax
from jax.experimental import pallas as pl
from jax.experimental.pallas import tpu as pltpu


def sinenet_kernel(x_ref, w1_ref, b1_ref, w2_ref, b2_ref, o_ref):
    # x_ref : (rows, 128) f32 VMEM -- batch folded onto sublane x lane axes
    # w1_ref: (H,) f32 SMEM -- fc1.weight (in_features == 1)
    # b1_ref: (H,) f32 SMEM -- fc1.bias
    # w2_ref: (H,) f32 SMEM -- fc2.weight
    # b2_ref: (1,) f32 SMEM -- fc2.bias
    # o_ref : (rows, 128) f32 VMEM
    x = x_ref[...]                                   # (rows, 128), full vregs
    H = w1_ref.shape[0]

    def body(k, acc):
        # fc1 for hidden unit k: scalar broadcast (SMEM scalar -> vreg), VPU only.
        z = w1_ref[k] * x + b1_ref[k]                # (rows, 128)
        # sigmoid(z) = 0.5*tanh(0.5*z) + 0.5  -> single EUP push per vreg.
        s = 0.5 * jnp.tanh(0.5 * z) + 0.5            # (rows, 128)
        # fc2 accumulation: no (H, rows, 128) intermediate, no XLU reduce.
        return acc + w2_ref[k] * s

    acc = lax.fori_loop(0, H, body, jnp.zeros_like(x), unroll=True)
    o_ref[...] = (acc + b2_ref[0]).astype(o_ref.dtype)


def sinenet_forward(x, w1, b1, w2, b2, *, rows_per_tile=32):
    """x: (N,1) f32; w1: (1,H); b1: (H,); w2: (H,1); b2: (1,). Returns (N,1) f32."""
    N = x.shape[0]
    H = w1.shape[1]

    # Batch -> (rows, 128) dense layout. 128 lanes are the fast vreg axis,
    # rows ride the sublanes. Default tile: 32 rows x 128 lanes = 4096 batch
    # elements per grid step (a few KiB of VMEM -> no VMEM pressure on any
    # generation, including v7x's 64 MiB).
    rows_needed = pl.cdiv(N, 128)
    rows_per_tile = min(rows_per_tile, rows_needed)
    if rows_per_tile < rows_needed:
        # Multi-step grid -> block sublane dim must be a multiple of 8.
        rows_per_tile = max(8, (rows_per_tile // 8) * 8)
    rows_total = pl.cdiv(rows_needed, rows_per_tile) * rows_per_tile
    n_pad = rows_total * 128

    x_flat = x.reshape(N).astype(jnp.float32)
    if n_pad != N:
        x_flat = jnp.pad(x_flat, (0, n_pad - N))     # pad tail: finite garbage, sliced off
    x2d = x_flat.reshape(rows_total, 128)

    w1_s = w1.reshape(H).astype(jnp.float32)
    b1_s = b1.reshape(H).astype(jnp.float32)
    w2_s = w2.reshape(H).astype(jnp.float32)
    b2_s = b2.reshape(1).astype(jnp.float32)

    grid = (rows_total // rows_per_tile,)

    out2d = pl.pallas_call(
        sinenet_kernel,
        out_shape=jax.ShapeDtypeStruct((rows_total, 128), jnp.float32),
        grid_spec=pltpu.PrefetchScalarGridSpec(
            num_scalar_prefetch=0,
            grid=grid,
            in_specs=[
                pl.BlockSpec((rows_per_tile, 128), lambda i: (i, 0)),   # x batch tile
                pl.BlockSpec(memory_space=pltpu.MemorySpace.SMEM),      # fc1.weight
                pl.BlockSpec(memory_space=pltpu.MemorySpace.SMEM),      # fc1.bias
                pl.BlockSpec(memory_space=pltpu.MemorySpace.SMEM),      # fc2.weight
                pl.BlockSpec(memory_space=pltpu.MemorySpace.SMEM),      # fc2.bias
            ],
            out_specs=pl.BlockSpec((rows_per_tile, 128), lambda i: (i, 0)),
        ),
        compiler_params=pltpu.CompilerParams(
            # Batch tiles are independent -> shard across TensorCores on v7x.
            dimension_semantics=("parallel",),
        ),
    )(x2d, w1_s, b1_s, w2_s, b2_s)

    return out2d.reshape(n_pad)[:N].reshape(N, 1)


if __name__ == "__main__":
    key = jax.random.PRNGKey(0)
    k_x, k_w1, k_b1, k_w2, k_b2 = jax.random.split(key, 5)

    N_HIDDEN = 32   # n_hidden_neurons
    BATCH = 200     # not a multiple of 128 -> exercises padding; collapses to one grid step

    # Deterministic init (mimics nn.Linear uniform(-1/sqrt(fan_in), 1/sqrt(fan_in)))
    bound1 = 1.0
    bound2 = 1.0 / jnp.sqrt(float(N_HIDDEN))
    w1 = jax.random.uniform(k_w1, (1, N_HIDDEN), jnp.float32, -bound1, bound1)
    b1 = jax.random.uniform(k_b1, (N_HIDDEN,), jnp.float32, -bound1, bound1)
    w2 = jax.random.uniform(k_w2, (N_HIDDEN, 1), jnp.float32, -bound2, bound2)
    b2 = jax.random.uniform(k_b2, (1,), jnp.float32, -bound2, bound2)

    x = jax.random.uniform(k_x, (BATCH, 1), jnp.float32, -3.0, 3.0)

    out = sinenet_forward(x, w1, b1, w2, b2)
    out = jax.block_until_ready(out)

    # Pure-JAX reference check (same forward as the PyTorch module)
    ref = jax.nn.sigmoid(x @ w1 + b1) @ w2 + b2
    assert out.shape == (BATCH, 1)
    assert jnp.allclose(out, ref, atol=1e-5, rtol=1e-5), "mismatch vs reference"

    print("KERNEL_OK")
</pallas_src>

<mosaic_0001>
module attributes {stable_mosaic.version = 11 : i64} {
  func.func @sinenet_kernel(%arg0: i32, %arg1: memref<2x128xf32, #tpu.memory_space<vmem>>, %arg2: memref<32xf32, #tpu.memory_space<smem>>, %arg3: memref<32xf32, #tpu.memory_space<smem>>, %arg4: memref<32xf32, #tpu.memory_space<smem>>, %arg5: memref<1xf32, #tpu.memory_space<smem>>, %arg6: memref<2x128xf32, #tpu.memory_space<vmem>>) attributes {dimension_semantics = [#tpu.dimension_semantics<parallel>], iteration_bounds = array<i64: 1>, scalar_prefetch = 0 : i64, scratch_operands = 0 : i64, tpu.core_type = #tpu.core_type<tc>, window_params = [{transform_indices = @transform_0, window_bounds = array<i64: 2, 128>}, {transform_indices = @transform_1, window_bounds = array<i64: 32>}, {transform_indices = @transform_2, window_bounds = array<i64: 32>}, {transform_indices = @transform_3, window_bounds = array<i64: 32>}, {transform_indices = @transform_4, window_bounds = array<i64: 1>}, {transform_indices = @transform_5, window_bounds = array<i64: 2, 128>}]} {
    %c0 = arith.constant 0 : index
    %c0_0 = arith.constant 0 : index
    %0 = vector.load %arg1[%c0, %c0_0] : memref<2x128xf32, #tpu.memory_space<vmem>>, vector<2x128xf32>
    %cst = arith.constant 0.000000e+00 : f32
    %1 = vector.broadcast %cst : f32 to vector<2x128xf32>
    %c0_i32 = arith.constant 0 : i32
    %2 = arith.index_cast %c0_i32 : i32 to index
    %3 = memref.load %arg2[%2] : memref<32xf32, #tpu.memory_space<smem>>
    %4 = vector.broadcast %3 : f32 to vector<2x128xf32>
    %5 = arith.mulf %4, %0 : vector<2x128xf32>
    %6 = arith.index_cast %c0_i32 : i32 to index
    %7 = memref.load %arg3[%6] : memref<32xf32, #tpu.memory_space<smem>>
    %8 = vector.broadcast %7 : f32 to vector<2x128xf32>
    %9 = arith.addf %5, %8 : vector<2x128xf32>
    %cst_1 = arith.constant 5.000000e-01 : f32
    %10 = vector.broadcast %cst_1 : f32 to vector<2x128xf32>
    %11 = arith.mulf %10, %9 : vector<2x128xf32>
    %12 = math.tanh %11 : vector<2x128xf32>
    %cst_2 = arith.constant 5.000000e-01 : f32
    %13 = vector.broadcast %cst_2 : f32 to vector<2x128xf32>
    %14 = arith.mulf %13, %12 : vector<2x128xf32>
    %cst_3 = arith.constant 5.000000e-01 : f32
    %15 = vector.broadcast %cst_3 : f32 to vector<2x128xf32>
    %16 = arith.addf %14, %15 : vector<2x128xf32>
    %17 = arith.index_cast %c0_i32 : i32 to index
    %18 = memref.load %arg4[%17] : memref<32xf32, #tpu.memory_space<smem>>
    %19 = vector.broadcast %18 : f32 to vector<2x128xf32>
    %20 = arith.mulf %19, %16 : vector<2x128xf32>
    %21 = arith.addf %1, %20 : vector<2x128xf32>
    %c1_i32 = arith.constant 1 : i32
    %22 = arith.index_cast %c1_i32 : i32 to index
    %23 = memref.load %arg2[%22] : memref<32xf32, #tpu.memory_space<smem>>
    %24 = vector.broadcast %23 : f32 to vector<2x128xf32>
    %25 = arith.mulf %24, %0 : vector<2x128xf32>
    %26 = arith.index_cast %c1_i32 : i32 to index
    %27 = memref.load %arg3[%26] : memref<32xf32, #tpu.memory_space<smem>>
    %28 = vector.broadcast %27 : f32 to vector<2x128xf32>
    %29 = arith.addf %25, %28 : vector<2x128xf32>
    %cst_4 = arith.constant 5.000000e-01 : f32
    %30 = vector.broadcast %cst_4 : f32 to vector<2x128xf32>
    %31 = arith.mulf %30, %29 : vector<2x128xf32>
    %32 = math.tanh %31 : vector<2x128xf32>
    %cst_5 = arith.constant 5.000000e-01 : f32
    %33 = vector.broadcast %cst_5 : f32 to vector<2x128xf32>
    %34 = arith.mulf %33, %32 : vector<2x128xf32>
    %cst_6 = arith.constant 5.000000e-01 : f32
    %35 = vector.broadcast %cst_6 : f32 to vector<2x128xf32>
    %36 = arith.addf %34, %35 : vector<2x128xf32>
    %37 = arith.index_cast %c1_i32 : i32 to index
    %38 = memref.load %arg4[%37] : memref<32xf32, #tpu.memory_space<smem>>
    %39 = vector.broadcast %38 : f32 to vector<2x128xf32>
    %40 = arith.mulf %39, %36 : vector<2x128xf32>
    %41 = arith.addf %21, %40 : vector<2x128xf32>
    %c2_i32 = arith.constant 2 : i32
    %42 = arith.index_cast %c2_i32 : i32 to index
    %43 = memref.load %arg2[%42] : memref<32xf32, #tpu.memory_space<smem>>
    %44 = vector.broadcast %43 : f32 to vector<2x128xf32>
    %45 = arith.mulf %44, %0 : vector<2x128xf32>
    %46 = arith.index_cast %c2_i32 : i32 to index
    %47 = memref.load %arg3[%46] : memref<32xf32, #tpu.memory_space<smem>>
    %48 = vector.broadcast %47 : f32 to vector<2x128xf32>
    %49 = arith.addf %45, %48 : vector<2x128xf32>
    %cst_7 = arith.constant 5.000000e-01 : f32
    %50 = vector.broadcast %cst_7 : f32 to vector<2x128xf32>
    %51 = arith.mulf %50, %49 : vector<2x128xf32>
    %52 = math.tanh %51 : vector<2x128xf32>
    %cst_8 = arith.constant 5.000000e-01 : f32
    %53 = vector.broadcast %cst_8 : f32 to vector<2x128xf32>
    %54 = arith.mulf %53, %52 : vector<2x128xf32>
    %cst_9 = arith.constant 5.000000e-01 : f32
    %55 = vector.broadcast %cst_9 : f32 to vector<2x128xf32>
    %56 = arith.addf %54, %55 : vector<2x128xf32>
    %57 = arith.index_cast %c2_i32 : i32 to index
    %58 = memref.load %arg4[%57] : memref<32xf32, #tpu.memory_space<smem>>
    %59 = vector.broadcast %58 : f32 to vector<2x128xf32>
    %60 = arith.mulf %59, %56 : vector<2x128xf32>
    %61 = arith.addf %41, %60 : vector<2x128xf32>
    %c3_i32 = arith.constant 3 : i32
    %62 = arith.index_cast %c3_i32 : i32 to index
    %63 = memref.load %arg2[%62] : memref<32xf32, #tpu.memory_space<smem>>
    %64 = vector.broadcast %63 : f32 to vector<2x128xf32>
    %65 = arith.mulf %64, %0 : vector<2x128xf32>
    %66 = arith.index_cast %c3_i32 : i32 to index
    %67 = memref.load %arg3[%66] : memref<32xf32, #tpu.memory_space<smem>>
    %68 = vector.broadcast %67 : f32 to vector<2x128xf32>
    %69 = arith.addf %65, %68 : vector<2x128xf32>
    %cst_10 = arith.constant 5.000000e-01 : f32
    %70 = vector.broadcast %cst_10 : f32 to vector<2x128xf32>
    %71 = arith.mulf %70, %69 : vector<2x128xf32>
    %72 = math.tanh %71 : vector<2x128xf32>
    %cst_11 = arith.constant 5.000000e-01 : f32
    %73 = vector.broadcast %cst_11 : f32 to vector<2x128xf32>
    %74 = arith.mulf %73, %72 : vector<2x128xf32>
    %cst_12 = arith.constant 5.000000e-01 : f32
    %75 = vector.broadcast %cst_12 : f32 to vector<2x128xf32>
    %76 = arith.addf %74, %75 : vector<2x128xf32>
    %77 = arith.index_cast %c3_i32 : i32 to index
    %78 = memref.load %arg4[%77] : memref<32xf32, #tpu.memory_space<smem>>
    %79 = vector.broadcast %78 : f32 to vector<2x128xf32>
    %80 = arith.mulf %79, %76 : vector<2x128xf32>
    %81 = arith.addf %61, %80 : vector<2x128xf32>
    %c4_i32 = arith.constant 4 : i32
    %82 = arith.index_cast %c4_i32 : i32 to index
    %83 = memref.load %arg2[%82] : memref<32xf32, #tpu.memory_space<smem>>
    %84 = vector.broadcast %83 : f32 to vector<2x128xf32>
    %85 = arith.mulf %84, %0 : vector<2x128xf32>
    %86 = arith.index_cast %c4_i32 : i32 to index
    %87 = memref.load %arg3[%86] : memref<32xf32, #tpu.memory_space<smem>>
    %88 = vector.broadcast %87 : f32 to vector<2x128xf32>
    %89 = arith.addf %85, %88 : vector<2x128xf32>
    %cst_13 = arith.constant 5.000000e-01 : f32
    %90 = vector.broadcast %cst_13 : f32 to vector<2x128xf32>
    %91 = arith.mulf %90, %89 : vector<2x128xf32>
    %92 = math.tanh %91 : vector<2x128xf32>
    %cst_14 = arith.constant 5.000000e-01 : f32
    %93 = vector.broadcast %cst_14 : f32 to vector<2x128xf32>
    %94 = arith.mulf %93, %92 : vector<2x128xf32>
    %cst_15 = arith.constant 5.000000e-01 : f32
    %95 = vector.broadcast %cst_15 : f32 to vector<2x128xf32>
    %96 = arith.addf %94, %95 : vector<2x128xf32>
    %97 = arith.index_cast %c4_i32 : i32 to index
    %98 = memref.load %arg4[%97] : memref<32xf32, #tpu.memory_space<smem>>
    %99 = vector.broadcast %98 : f32 to vector<2x128xf32>
    %100 = arith.mulf %99, %96 : vector<2x128xf32>
    %101 = arith.addf %81, %100 : vector<2x128xf32>
    %c5_i32 = arith.constant 5 : i32
    %102 = arith.index_cast %c5_i32 : i32 to index
    %103 = memref.load %arg2[%102] : memref<32xf32, #tpu.memory_space<smem>>
    %104 = vector.broadcast %103 : f32 to vector<2x128xf32>
    %105 = arith.mulf %104, %0 : vector<2x128xf32>
    %106 = arith.index_cast %c5_i32 : i32 to index
    %107 = memref.load %arg3[%106] : memref<32xf32, #tpu.memory_space<smem>>
    %108 = vector.broadcast %107 : f32 to vector<2x128xf32>
    %109 = arith.addf %105, %108 : vector<2x128xf32>
    %cst_16 = arith.constant 5.000000e-01 : f32
    %110 = vector.broadcast %cst_16 : f32 to vector<2x128xf32>
    %111 = arith.mulf %110, %109 : vector<2x128xf32>
    %112 = math.tanh %111 : vector<2x128xf32>
    %cst_17 = arith.constant 5.000000e-01 : f32
    %113 = vector.broadcast %cst_17 : f32 to vector<2x128xf32>
    %114 = arith.mulf %113, %112 : vector<2x128xf32>
    %cst_18 = arith.constant 5.000000e-01 : f32
    %115 = vector.broadcast %cst_18 : f32 to vector<2x128xf32>
    %116 = arith.addf %114, %115 : vector<2x128xf32>
    %117 = arith.index_cast %c5_i32 : i32 to index
    %118 = memref.load %arg4[%117] : memref<32xf32, #tpu.memory_space<smem>>
    %119 = vector.broadcast %118 : f32 to vector<2x128xf32>
    %120 = arith.mulf %119, %116 : vector<2x128xf32>
    %121 = arith.addf %101, %120 : vector<2x128xf32>
    %c6_i32 = arith.constant 6 : i32
    %122 = arith.index_cast %c6_i32 : i32 to index
    %123 = memref.load %arg2[%122] : memref<32xf32, #tpu.memory_space<smem>>
    %124 = vector.broadcast %123 : f32 to vector<2x128xf32>
    %125 = arith.mulf %124, %0 : vector<2x128xf32>
    %126 = arith.index_cast %c6_i32 : i32 to index
    %127 = memref.load %arg3[%126] : memref<32xf32, #tpu.memory_space<smem>>
    %128 = vector.broadcast %127 : f32 to vector<2x128xf32>
    %129 = arith.addf %125, %128 : vector<2x128xf32>
    %cst_19 = arith.constant 5.000000e-01 : f32
    %130 = vector.broadcast %cst_19 : f32 to vector<2x128xf32>
    %131 = arith.mulf %130, %129 : vector<2x128xf32>
    %132 = math.tanh %131 : vector<2x128xf32>
    %cst_20 = arith.constant 5.000000e-01 : f32
    %133 = vector.broadcast %cst_20 : f32 to vector<2x128xf32>
    %134 = arith.mulf %133, %132 : vector<2x128xf32>
    %cst_21 = arith.constant 5.000000e-01 : f32
    %135 = vector.broadcast %cst_21 : f32 to vector<2x128xf32>
    %136 = arith.addf %134, %135 : vector<2x128xf32>
    %137 = arith.index_cast %c6_i32 : i32 to index
    %138 = memref.load %arg4[%137] : memref<32xf32, #tpu.memory_space<smem>>
    %139 = vector.broadcast %138 : f32 to vector<2x128xf32>
    %140 = arith.mulf %139, %136 : vector<2x128xf32>
    %141 = arith.addf %121, %140 : vector<2x128xf32>
    %c7_i32 = arith.constant 7 : i32
    %142 = arith.index_cast %c7_i32 : i32 to index
    %143 = memref.load %arg2[%142] : memref<32xf32, #tpu.memory_space<smem>>
    %144 = vector.broadcast %143 : f32 to vector<2x128xf32>
    %145 = arith.mulf %144, %0 : vector<2x128xf32>
    %146 = arith.index_cast %c7_i32 : i32 to index
    %147 = memref.load %arg3[%146] : memref<32xf32, #tpu.memory_space<smem>>
    %148 = vector.broadcast %147 : f32 to vector<2x128xf32>
    %149 = arith.addf %145, %148 : vector<2x128xf32>
    %cst_22 = arith.constant 5.000000e-01 : f32
    %150 = vector.broadcast %cst_22 : f32 to vector<2x128xf32>
    %151 = arith.mulf %150, %149 : vector<2x128xf32>
    %152 = math.tanh %151 : vector<2x128xf32>
    %cst_23 = arith.constant 5.000000e-01 : f32
    %153 = vector.broadcast %cst_23 : f32 to vector<2x128xf32>
    %154 = arith.mulf %153, %152 : vector<2x128xf32>
    %cst_24 = arith.constant 5.000000e-01 : f32
    %155 = vector.broadcast %cst_24 : f32 to vector<2x128xf32>
    %156 = arith.addf %154, %155 : vector<2x128xf32>
    %157 = arith.index_cast %c7_i32 : i32 to index
    %158 = memref.load %arg4[%157] : memref<32xf32, #tpu.memory_space<smem>>
    %159 = vector.broadcast %158 : f32 to vector<2x128xf32>
    %160 = arith.mulf %159, %156 : vector<2x128xf32>
    %161 = arith.addf %141, %160 : vector<2x128xf32>
    %c8_i32 = arith.constant 8 : i32
    %162 = arith.index_cast %c8_i32 : i32 to index
    %163 = memref.load %arg2[%162] : memref<32xf32, #tpu.memory_space<smem>>
    %164 = vector.broadcast %163 : f32 to vector<2x128xf32>
    %165 = arith.mulf %164, %0 : vector<2x128xf32>
    %166 = arith.index_cast %c8_i32 : i32 to index
    %167 = memref.load %arg3[%166] : memref<32xf32, #tpu.memory_space<smem>>
    %168 = vector.broadcast %167 : f32 to vector<2x128xf32>
    %169 = arith.addf %165, %168 : vector<2x128xf32>
    %cst_25 = arith.constant 5.000000e-01 : f32
    %170 = vector.broadcast %cst_25 : f32 to vector<2x128xf32>
    %171 = arith.mulf %170, %169 : vector<2x128xf32>
    %172 = math.tanh %171 : vector<2x128xf32>
    %cst_26 = arith.constant 5.000000e-01 : f32
    %173 = vector.broadcast %cst_26 : f32 to vector<2x128xf32>
    %174 = arith.mulf %173, %172 : vector<2x128xf32>
    %cst_27 = arith.constant 5.000000e-01 : f32
    %175 = vector.broadcast %cst_27 : f32 to vector<2x128xf32>
    %176 = arith.addf %174, %175 : vector<2x128xf32>
    %177 = arith.index_cast %c8_i32 : i32 to index
    %178 = memref.load %arg4[%177] : memref<32xf32, #tpu.memory_space<smem>>
    %179 = vector.broadcast %178 : f32 to vector<2x128xf32>
    %180 = arith.mulf %179, %176 : vector<2x128xf32>
    %181 = arith.addf %161, %180 : vector<2x128xf32>
    %c9_i32 = arith.constant 9 : i32
    %182 = arith.index_cast %c9_i32 : i32 to index
    %183 = memref.load %arg2[%182] : memref<32xf32, #tpu.memory_space<smem>>
    %184 = vector.broadcast %183 : f32 to vector<2x128xf32>
    %185 = arith.mulf %184, %0 : vector<2x128xf32>
    %186 = arith.index_cast %c9_i32 : i32 to index
    %187 = memref.load %arg3[%186] : memref<32xf32, #tpu.memory_space<smem>>
    %188 = vector.broadcast %187 : f32 to vector<2x128xf32>
    %189 = arith.addf %185, %188 : vector<2x128xf32>
    %cst_28 = arith.constant 5.000000e-01 : f32
    %190 = vector.broadcast %cst_28 : f32 to vector<2x128xf32>
    %191 = arith.mulf %190, %189 : vector<2x128xf32>
    %192 = math.tanh %191 : vector<2x128xf32>
    %cst_29 = arith.constant 5.000000e-01 : f32
    %193 = vector.broadcast %cst_29 : f32 to vector<2x128xf32>
    %194 = arith.mulf %193, %192 : vector<2x128xf32>
    %cst_30 = arith.constant 5.000000e-01 : f32
    %195 = vector.broadcast %cst_30 : f32 to vector<2x128xf32>
    %196 = arith.addf %194, %195 : vector<2x128xf32>
    %197 = arith.index_cast %c9_i32 : i32 to index
    %198 = memref.load %arg4[%197] : memref<32xf32, #tpu.memory_space<smem>>
    %199 = vector.broadcast %198 : f32 to vector<2x128xf32>
    %200 = arith.mulf %199, %196 : vector<2x128xf32>
    %201 = arith.addf %181, %200 : vector<2x128xf32>
    %c10_i32 = arith.constant 10 : i32
    %202 = arith.index_cast %c10_i32 : i32 to index
    %203 = memref.load %arg2[%202] : memref<32xf32, #tpu.memory_space<smem>>
    %204 = vector.broadcast %203 : f32 to vector<2x128xf32>
    %205 = arith.mulf %204, %0 : vector<2x128xf32>
    %206 = arith.index_cast %c10_i32 : i32 to index
    %207 = memref.load %arg3[%206] : memref<32xf32, #tpu.memory_space<smem>>
    %208 = vector.broadcast %207 : f32 to vector<2x128xf32>
    %209 = arith.addf %205, %208 : vector<2x128xf32>
    %cst_31 = arith.constant 5.000000e-01 : f32
    %210 = vector.broadcast %cst_31 : f32 to vector<2x128xf32>
    %211 = arith.mulf %210, %209 : vector<2x128xf32>
    %212 = math.tanh %211 : vector<2x128xf32>
    %cst_32 = arith.constant 5.000000e-01 : f32
    %213 = vector.broadcast %cst_32 : f32 to vector<2x128xf32>
    %214 = arith.mulf %213, %212 : vector<2x128xf32>
    %cst_33 = arith.constant 5.000000e-01 : f32
    %215 = vector.broadcast %cst_33 : f32 to vector<2x128xf32>
    %216 = arith.addf %214, %215 : vector<2x128xf32>
    %217 = arith.index_cast %c10_i32 : i32 to index
    %218 = memref.load %arg4[%217] : memref<32xf32, #tpu.memory_space<smem>>
    %219 = vector.broadcast %218 : f32 to vector<2x128xf32>
    %220 = arith.mulf %219, %216 : vector<2x128xf32>
    %221 = arith.addf %201, %220 : vector<2x128xf32>
    %c11_i32 = arith.constant 11 : i32
    %222 = arith.index_cast %c11_i32 : i32 to index
    %223 = memref.load %arg2[%222] : memref<32xf32, #tpu.memory_space<smem>>
    %224 = vector.broadcast %223 : f32 to vector<2x128xf32>
    %225 = arith.mulf %224, %0 : vector<2x128xf32>
    %226 = arith.index_cast %c11_i32 : i32 to index
    %227 = memref.load %arg3[%226] : memref<32xf32, #tpu.memory_space<smem>>
    %228 = vector.broadcast %227 : f32 to vector<2x128xf32>
    %229 = arith.addf %225, %228 : vector<2x128xf32>
    %cst_34 = arith.constant 5.000000e-01 : f32
    %230 = vector.broadcast %cst_34 : f32 to vector<2x128xf32>
    %231 = arith.mulf %230, %229 : vector<2x128xf32>
    %232 = math.tanh %231 : vector<2x128xf32>
    %cst_35 = arith.constant 5.000000e-01 : f32
    %233 = vector.broadcast %cst_35 : f32 to vector<2x128xf32>
    %234 = arith.mulf %233, %232 : vector<2x128xf32>
    %cst_36 = arith.constant 5.000000e-01 : f32
    %235 = vector.broadcast %cst_36 : f32 to vector<2x128xf32>
    %236 = arith.addf %234, %235 : vector<2x128xf32>
    %237 = arith.index_cast %c11_i32 : i32 to index
    %238 = memref.load %arg4[%237] : memref<32xf32, #tpu.memory_space<smem>>
    %239 = vector.broadcast %238 : f32 to vector<2x128xf32>
    %240 = arith.mulf %239, %236 : vector<2x128xf32>
    %241 = arith.addf %221, %240 : vector<2x128xf32>
    %c12_i32 = arith.constant 12 : i32
    %242 = arith.index_cast %c12_i32 : i32 to index
    %243 = memref.load %arg2[%242] : memref<32xf32, #tpu.memory_space<smem>>
    %244 = vector.broadcast %243 : f32 to vector<2x128xf32>
    %245 = arith.mulf %244, %0 : vector<2x128xf32>
    %246 = arith.index_cast %c12_i32 : i32 to index
    %247 = memref.load %arg3[%246] : memref<32xf32, #tpu.memory_space<smem>>
    %248 = vector.broadcast %247 : f32 to vector<2x128xf32>
    %249 = arith.addf %245, %248 : vector<2x128xf32>
    %cst_37 = arith.constant 5.000000e-01 : f32
    %250 = vector.broadcast %cst_37 : f32 to vector<2x128xf32>
    %251 = arith.mulf %250, %249 : vector<2x128xf32>
    %252 = math.tanh %251 : vector<2x128xf32>
    %cst_38 = arith.constant 5.000000e-01 : f32
    %253 = vector.broadcast %cst_38 : f32 to vector<2x128xf32>
    %254 = arith.mulf %253, %252 : vector<2x128xf32>
    %cst_39 = arith.constant 5.000000e-01 : f32
    %255 = vector.broadcast %cst_39 : f32 to vector<2x128xf32>
    %256 = arith.addf %254, %255 : vector<2x128xf32>
    %257 = arith.index_cast %c12_i32 : i32 to index
    %258 = memref.load %arg4[%257] : memref<32xf32, #tpu.memory_space<smem>>
    %259 = vector.broadcast %258 : f32 to vector<2x128xf32>
    %260 = arith.mulf %259, %256 : vector<2x128xf32>
    %261 = arith.addf %241, %260 : vector<2x128xf32>
    %c13_i32 = arith.constant 13 : i32
    %262 = arith.index_cast %c13_i32 : i32 to index
    %263 = memref.load %arg2[%262] : memref<32xf32, #tpu.memory_space<smem>>
    %264 = vector.broadcast %263 : f32 to vector<2x128xf32>
    %265 = arith.mulf %264, %0 : vector<2x128xf32>
    %266 = arith.index_cast %c13_i32 : i32 to index
    %267 = memref.load %arg3[%266] : memref<32xf32, #tpu.memory_space<smem>>
    %268 = vector.broadcast %267 : f32 to vector<2x128xf32>
    %269 = arith.addf %265, %268 : vector<2x128xf32>
    %cst_40 = arith.constant 5.000000e-01 : f32
    %270 = vector.broadcast %cst_40 : f32 to vector<2x128xf32>
    %271 = arith.mulf %270, %269 : vector<2x128xf32>
    %272 = math.tanh %271 : vector<2x128xf32>
    %cst_41 = arith.constant 5.000000e-01 : f32
    %273 = vector.broadcast %cst_41 : f32 to vector<2x128xf32>
    %274 = arith.mulf %273, %272 : vector<2x128xf32>
    %cst_42 = arith.constant 5.000000e-01 : f32
    %275 = vector.broadcast %cst_42 : f32 to vector<2x128xf32>
    %276 = arith.addf %274, %275 : vector<2x128xf32>
    %277 = arith.index_cast %c13_i32 : i32 to index
    %278 = memref.load %arg4[%277] : memref<32xf32, #tpu.memory_space<smem>>
    %279 = vector.broadcast %278 : f32 to vector<2x128xf32>
    %280 = arith.mulf %279, %276 : vector<2x128xf32>
    %281 = arith.addf %261, %280 : vector<2x128xf32>
    %c14_i32 = arith.constant 14 : i32
    %282 = arith.index_cast %c14_i32 : i32 to index
    %283 = memref.load %arg2[%282] : memref<32xf32, #tpu.memory_space<smem>>
    %284 = vector.broadcast %283 : f32 to vector<2x128xf32>
    %285 = arith.mulf %284, %0 : vector<2x128xf32>
    %286 = arith.index_cast %c14_i32 : i32 to index
    %287 = memref.load %arg3[%286] : memref<32xf32, #tpu.memory_space<smem>>
    %288 = vector.broadcast %287 : f32 to vector<2x128xf32>
    %289 = arith.addf %285, %288 : vector<2x128xf32>
    %cst_43 = arith.constant 5.000000e-01 : f32
    %290 = vector.broadcast %cst_43 : f32 to vector<2x128xf32>
    %291 = arith.mulf %290, %289 : vector<2x128xf32>
    %292 = math.tanh %291 : vector<2x128xf32>
    %cst_44 = arith.constant 5.000000e-01 : f32
    %293 = vector.broadcast %cst_44 : f32 to vector<2x128xf32>
    %294 = arith.mulf %293, %292 : vector<2x128xf32>
    %cst_45 = arith.constant 5.000000e-01 : f32
    %295 = vector.broadcast %cst_45 : f32 to vector<2x128xf32>
    %296 = arith.addf %294, %295 : vector<2x128xf32>
    %297 = arith.index_cast %c14_i32 : i32 to index
    %298 = memref.load %arg4[%297] : memref<32xf32, #tpu.memory_space<smem>>
    %299 = vector.broadcast %298 : f32 to vector<2x128xf32>
    %300 = arith.mulf %299, %296 : vector<2x128xf32>
    %301 = arith.addf %281, %300 : vector<2x128xf32>
    %c15_i32 = arith.constant 15 : i32
    %302 = arith.index_cast %c15_i32 : i32 to index
    %303 = memref.load %arg2[%302] : memref<32xf32, #tpu.memory_space<smem>>
    %304 = vector.broadcast %303 : f32 to vector<2x128xf32>
    %305 = arith.mulf %304, %0 : vector<2x128xf32>
    %306 = arith.index_cast %c15_i32 : i32 to index
    %307 = memref.load %arg3[%306] : memref<32xf32, #tpu.memory_space<smem>>
    %308 = vector.broadcast %307 : f32 to vector<2x128xf32>
    %309 = arith.addf %305, %308 : vector<2x128xf32>
    %cst_46 = arith.constant 5.000000e-01 : f32
    %310 = vector.broadcast %cst_46 : f32 to vector<2x128xf32>
    %311 = arith.mulf %310, %309 : vector<2x128xf32>
    %312 = math.tanh %311 : vector<2x128xf32>
    %cst_47 = arith.constant 5.000000e-01 : f32
    %313 = vector.broadcast %cst_47 : f32 to vector<2x128xf32>
    %314 = arith.mulf %313, %312 : vector<2x128xf32>
    %cst_48 = arith.constant 5.000000e-01 : f32
    %315 = vector.broadcast %cst_48 : f32 to vector<2x128xf32>
    %316 = arith.addf %314, %315 : vector<2x128xf32>
    %317 = arith.index_cast %c15_i32 : i32 to index
    %318 = memref.load %arg4[%317] : memref<32xf32, #tpu.memory_space<smem>>
    %319 = vector.broadcast %318 : f32 to vector<2x128xf32>
    %320 = arith.mulf %319, %316 : vector<2x128xf32>
    %321 = arith.addf %301, %320 : vector<2x128xf32>
    %c16_i32 = arith.constant 16 : i32
    %322 = arith.index_cast %c16_i32 : i32 to index
    %323 = memref.load %arg2[%322] : memref<32xf32, #tpu.memory_space<smem>>
    %324 = vector.broadcast %323 : f32 to vector<2x128xf32>
    %325 = arith.mulf %324, %0 : vector<2x128xf32>
    %326 = arith.index_cast %c16_i32 : i32 to index
    %327 = memref.load %arg3[%326] : memref<32xf32, #tpu.memory_space<smem>>
    %328 = vector.broadcast %327 : f32 to vector<2x128xf32>
    %329 = arith.addf %325, %328 : vector<2x128xf32>
    %cst_49 = arith.constant 5.000000e-01 : f32
    %330 = vector.broadcast %cst_49 : f32 to vector<2x128xf32>
    %331 = arith.mulf %330, %329 : vector<2x128xf32>
    %332 = math.tanh %331 : vector<2x128xf32>
    %cst_50 = arith.constant 5.000000e-01 : f32
    %333 = vector.broadcast %cst_50 : f32 to vector<2x128xf32>
    %334 = arith.mulf %333, %332 : vector<2x128xf32>
    %cst_51 = arith.constant 5.000000e-01 : f32
    %335 = vector.broadcast %cst_51 : f32 to vector<2x128xf32>
    %336 = arith.addf %334, %335 : vector<2x128xf32>
    %337 = arith.index_cast %c16_i32 : i32 to index
    %338 = memref.load %arg4[%337] : memref<32xf32, #tpu.memory_space<smem>>
    %339 = vector.broadcast %338 : f32 to vector<2x128xf32>
    %340 = arith.mulf %339, %336 : vector<2x128xf32>
    %341 = arith.addf %321, %340 : vector<2x128xf32>
    %c17_i32 = arith.constant 17 : i32
    %342 = arith.index_cast %c17_i32 : i32 to index
    %343 = memref.load %arg2[%342] : memref<32xf32, #tpu.memory_space<smem>>
    %344 = vector.broadcast %343 : f32 to vector<2x128xf32>
    %345 = arith.mulf %344, %0 : vector<2x128xf32>
    %346 = arith.index_cast %c17_i32 : i32 to index
    %347 = memref.load %arg3[%346] : memref<32xf32, #tpu.memory_space<smem>>
    %348 = vector.broadcast %347 : f32 to vector<2x128xf32>
    %349 = arith.addf %345, %348 : vector<2x128xf32>
    %cst_52 = arith.constant 5.000000e-01 : f32
    %350 = vector.broadcast %cst_52 : f32 to vector<2x128xf32>
    %351 = arith.mulf %350, %349 : vector<2x128xf32>
    %352 = math.tanh %351 : vector<2x128xf32>
    %cst_53 = arith.constant 5.000000e-01 : f32
    %353 = vector.broadcast %cst_53 : f32 to vector<2x128xf32>
    %354 = arith.mulf %353, %352 : vector<2x128xf32>
    %cst_54 = arith.constant 5.000000e-01 : f32
    %355 = vector.broadcast %cst_54 : f32 to vector<2x128xf32>
    %356 = arith.addf %354, %355 : vector<2x128xf32>
    %357 = arith.index_cast %c17_i32 : i32 to index
    %358 = memref.load %arg4[%357] : memref<32xf32, #tpu.memory_space<smem>>
    %359 = vector.broadcast %358 : f32 to vector<2x128xf32>
    %360 = arith.mulf %359, %356 : vector<2x128xf32>
    %361 = arith.addf %341, %360 : vector<2x128xf32>
    %c18_i32 = arith.constant 18 : i32
    %362 = arith.index_cast %c18_i32 : i32 to index
    %363 = memref.load %arg2[%362] : memref<32xf32, #tpu.memory_space<smem>>
    %364 = vector.broadcast %363 : f32 to vector<2x128xf32>
    %365 = arith.mulf %364, %0 : vector<2x128xf32>
    %366 = arith.index_cast %c18_i32 : i32 to index
    %367 = memref.load %arg3[%366] : memref<32xf32, #tpu.memory_space<smem>>
    %368 = vector.broadcast %367 : f32 to vector<2x128xf32>
    %369 = arith.addf %365, %368 : vector<2x128xf32>
    %cst_55 = arith.constant 5.000000e-01 : f32
    %370 = vector.broadcast %cst_55 : f32 to vector<2x128xf32>
    %371 = arith.mulf %370, %369 : vector<2x128xf32>
    %372 = math.tanh %371 : vector<2x128xf32>
    %cst_56 = arith.constant 5.000000e-01 : f32
    %373 = vector.broadcast %cst_56 : f32 to vector<2x128xf32>
    %374 = arith.mulf %373, %372 : vector<2x128xf32>
    %cst_57 = arith.constant 5.000000e-01 : f32
    %375 = vector.broadcast %cst_57 : f32 to vector<2x128xf32>
    %376 = arith.addf %374, %375 : vector<2x128xf32>
    %377 = arith.index_cast %c18_i32 : i32 to index
    %378 = memref.load %arg4[%377] : memref<32xf32, #tpu.memory_space<smem>>
    %379 = vector.broadcast %378 : f32 to vector<2x128xf32>
    %380 = arith.mulf %379, %376 : vector<2x128xf32>
    %381 = arith.addf %361, %380 : vector<2x128xf32>
    %c19_i32 = arith.constant 19 : i32
    %382 = arith.index_cast %c19_i32 : i32 to index
    %383 = memref.load %arg2[%382] : memref<32xf32, #tpu.memory_space<smem>>
    %384 = vector.broadcast %383 : f32 to vector<2x128xf32>
    %385 = arith.mulf %384, %0 : vector<2x128xf32>
    %386 = arith.index_cast %c19_i32 : i32 to index
    %387 = memref.load %arg3[%386] : memref<32xf32, #tpu.memory_space<smem>>
    %388 = vector.broadcast %387 : f32 to vector<2x128xf32>
    %389 = arith.addf %385, %388 : vector<2x128xf32>
    %cst_58 = arith.constant 5.000000e-01 : f32
    %390 = vector.broadcast %cst_58 : f32 to vector<2x128xf32>
    %391 = arith.mulf %390, %389 : vector<2x128xf32>
    %392 = math.tanh %391 : vector<2x128xf32>
    %cst_59 = arith.constant 5.000000e-01 : f32
    %393 = vector.broadcast %cst_59 : f32 to vector<2x128xf32>
    %394 = arith.mulf %393, %392 : vector<2x128xf32>
    %cst_60 = arith.constant 5.000000e-01 : f32
    %395 = vector.broadcast %cst_60 : f32 to vector<2x128xf32>
    %396 = arith.addf %394, %395 : vector<2x128xf32>
    %397 = arith.index_cast %c19_i32 : i32 to index
    %398 = memref.load %arg4[%397] : memref<32xf32, #tpu.memory_space<smem>>
    %399 = vector.broadcast %398 : f32 to vector<2x128xf32>
    %400 = arith.mulf %399, %396 : vector<2x128xf32>
    %401 = arith.addf %381, %400 : vector<2x128xf32>
    %c20_i32 = arith.constant 20 : i32
    %402 = arith.index_cast %c20_i32 : i32 to index
    %403 = memref.load %arg2[%402] : memref<32xf32, #tpu.memory_space<smem>>
    %404 = vector.broadcast %403 : f32 to vector<2x128xf32>
    %405 = arith.mulf %404, %0 : vector<2x128xf32>
    %406 = arith.index_cast %c20_i32 : i32 to index
    %407 = memref.load %arg3[%406] : memref<32xf32, #tpu.memory_space<smem>>
    %408 = vector.broadcast %407 : f32 to vector<2x128xf32>
    %409 = arith.addf %405, %408 : vector<2x128xf32>
    %cst_61 = arith.constant 5.000000e-01 : f32
    %410 = vector.broadcast %cst_61 : f32 to vector<2x128xf32>
    %411 = arith.mulf %410, %409 : vector<2x128xf32>
    %412 = math.tanh %411 : vector<2x128xf32>
    %cst_62 = arith.constant 5.000000e-01 : f32
    %413 = vector.broadcast %cst_62 : f32 to vector<2x128xf32>
    %414 = arith.mulf %413, %412 : vector<2x128xf32>
    %cst_63 = arith.constant 5.000000e-01 : f32
    %415 = vector.broadcast %cst_63 : f32 to vector<2x128xf32>
    %416 = arith.addf %414, %415 : vector<2x128xf32>
    %417 = arith.index_cast %c20_i32 : i32 to index
    %418 = memref.load %arg4[%417] : memref<32xf32, #tpu.memory_space<smem>>
    %419 = vector.broadcast %418 : f32 to vector<2x128xf32>
    %420 = arith.mulf %419, %416 : vector<2x128xf32>
    %421 = arith.addf %401, %420 : vector<2x128xf32>
    %c21_i32 = arith.constant 21 : i32
    %422 = arith.index_cast %c21_i32 : i32 to index
    %423 = memref.load %arg2[%422] : memref<32xf32, #tpu.memory_space<smem>>
    %424 = vector.broadcast %423 : f32 to vector<2x128xf32>
    %425 = arith.mulf %424, %0 : vector<2x128xf32>
    %426 = arith.index_cast %c21_i32 : i32 to index
    %427 = memref.load %arg3[%426] : memref<32xf32, #tpu.memory_space<smem>>
    %428 = vector.broadcast %427 : f32 to vector<2x128xf32>
    %429 = arith.addf %425, %428 : vector<2x128xf32>
    %cst_64 = arith.constant 5.000000e-01 : f32
    %430 = vector.broadcast %cst_64 : f32 to vector<2x128xf32>
    %431 = arith.mulf %430, %429 : vector<2x128xf32>
    %432 = math.tanh %431 : vector<2x128xf32>
    %cst_65 = arith.constant 5.000000e-01 : f32
    %433 = vector.broadcast %cst_65 : f32 to vector<2x128xf32>
    %434 = arith.mulf %433, %432 : vector<2x128xf32>
    %cst_66 = arith.constant 5.000000e-01 : f32
    %435 = vector.broadcast %cst_66 : f32 to vector<2x128xf32>
    %436 = arith.addf %434, %435 : vector<2x128xf32>
    %437 = arith.index_cast %c21_i32 : i32 to index
    %438 = memref.load %arg4[%437] : memref<32xf32, #tpu.memory_space<smem>>
    %439 = vector.broadcast %438 : f32 to vector<2x128xf32>
    %440 = arith.mulf %439, %436 : vector<2x128xf32>
    %441 = arith.addf %421, %440 : vector<2x128xf32>
    %c22_i32 = arith.constant 22 : i32
    %442 = arith.index_cast %c22_i32 : i32 to index
    %443 = memref.load %arg2[%442] : memref<32xf32, #tpu.memory_space<smem>>
    %444 = vector.broadcast %443 : f32 to vector<2x128xf32>
    %445 = arith.mulf %444, %0 : vector<2x128xf32>
    %446 = arith.index_cast %c22_i32 : i32 to index
    %447 = memref.load %arg3[%446] : memref<32xf32, #tpu.memory_space<smem>>
    %448 = vector.broadcast %447 : f32 to vector<2x128xf32>
    %449 = arith.addf %445, %448 : vector<2x128xf32>
    %cst_67 = arith.constant 5.000000e-01 : f32
    %450 = vector.broadcast %cst_67 : f32 to vector<2x128xf32>
    %451 = arith.mulf %450, %449 : vector<2x128xf32>
    %452 = math.tanh %451 : vector<2x128xf32>
    %cst_68 = arith.constant 5.000000e-01 : f32
    %453 = vector.broadcast %cst_68 : f32 to vector<2x128xf32>
    %454 = arith.mulf %453, %452 : vector<2x128xf32>
    %cst_69 = arith.constant 5.000000e-01 : f32
    %455 = vector.broadcast %cst_69 : f32 to vector<2x128xf32>
    %456 = arith.addf %454, %455 : vector<2x128xf32>
    %457 = arith.index_cast %c22_i32 : i32 to index
    %458 = memref.load %arg4[%457] : memref<32xf32, #tpu.memory_space<smem>>
    %459 = vector.broadcast %458 : f32 to vector<2x128xf32>
    %460 = arith.mulf %459, %456 : vector<2x128xf32>
    %461 = arith.addf %441, %460 : vector<2x128xf32>
    %c23_i32 = arith.constant 23 : i32
    %462 = arith.index_cast %c23_i32 : i32 to index
    %463 = memref.load %arg2[%462] : memref<32xf32, #tpu.memory_space<smem>>
    %464 = vector.broadcast %463 : f32 to vector<2x128xf32>
    %465 = arith.mulf %464, %0 : vector<2x128xf32>
    %466 = arith.index_cast %c23_i32 : i32 to index
    %467 = memref.load %arg3[%466] : memref<32xf32, #tpu.memory_space<smem>>
    %468 = vector.broadcast %467 : f32 to vector<2x128xf32>
    %469 = arith.addf %465, %468 : vector<2x128xf32>
    %cst_70 = arith.constant 5.000000e-01 : f32
    %470 = vector.broadcast %cst_70 : f32 to vector<2x128xf32>
    %471 = arith.mulf %470, %469 : vector<2x128xf32>
    %472 = math.tanh %471 : vector<2x128xf32>
    %cst_71 = arith.constant 5.000000e-01 : f32
    %473 = vector.broadcast %cst_71 : f32 to vector<2x128xf32>
    %474 = arith.mulf %473, %472 : vector<2x128xf32>
    %cst_72 = arith.constant 5.000000e-01 : f32
    %475 = vector.broadcast %cst_72 : f32 to vector<2x128xf32>
    %476 = arith.addf %474, %475 : vector<2x128xf32>
    %477 = arith.index_cast %c23_i32 : i32 to index
    %478 = memref.load %arg4[%477] : memref<32xf32, #tpu.memory_space<smem>>
    %479 = vector.broadcast %478 : f32 to vector<2x128xf32>
    %480 = arith.mulf %479, %476 : vector<2x128xf32>
    %481 = arith.addf %461, %480 : vector<2x128xf32>
    %c24_i32 = arith.constant 24 : i32
    %482 = arith.index_cast %c24_i32 : i32 to index
    %483 = memref.load %arg2[%482] : memref<32xf32, #tpu.memory_space<smem>>
    %484 = vector.broadcast %483 : f32 to vector<2x128xf32>
    %485 = arith.mulf %484, %0 : vector<2x128xf32>
    %486 = arith.index_cast %c24_i32 : i32 to index
    %487 = memref.load %arg3[%486] : memref<32xf32, #tpu.memory_space<smem>>
    %488 = vector.broadcast %487 : f32 to vector<2x128xf32>
    %489 = arith.addf %485, %488 : vector<2x128xf32>
    %cst_73 = arith.constant 5.000000e-01 : f32
    %490 = vector.broadcast %cst_73 : f32 to vector<2x128xf32>
    %491 = arith.mulf %490, %489 : vector<2x128xf32>
    %492 = math.tanh %491 : vector<2x128xf32>
    %cst_74 = arith.constant 5.000000e-01 : f32
    %493 = vector.broadcast %cst_74 : f32 to vector<2x128xf32>
    %494 = arith.mulf %493, %492 : vector<2x128xf32>
    %cst_75 = arith.constant 5.000000e-01 : f32
    %495 = vector.broadcast %cst_75 : f32 to vector<2x128xf32>
    %496 = arith.addf %494, %495 : vector<2x128xf32>
    %497 = arith.index_cast %c24_i32 : i32 to index
    %498 = memref.load %arg4[%497] : memref<32xf32, #tpu.memory_space<smem>>
    %499 = vector.broadcast %498 : f32 to vector<2x128xf32>
    %500 = arith.mulf %499, %496 : vector<2x128xf32>
    %501 = arith.addf %481, %500 : vector<2x128xf32>
    %c25_i32 = arith.constant 25 : i32
    %502 = arith.index_cast %c25_i32 : i32 to index
    %503 = memref.load %arg2[%502] : memref<32xf32, #tpu.memory_space<smem>>
    %504 = vector.broadcast %503 : f32 to vector<2x128xf32>
    %505 = arith.mulf %504, %0 : vector<2x128xf32>
    %506 = arith.index_cast %c25_i32 : i32 to index
    %507 = memref.load %arg3[%506] : memref<32xf32, #tpu.memory_space<smem>>
    %508 = vector.broadcast %507 : f32 to vector<2x128xf32>
    %509 = arith.addf %505, %508 : vector<2x128xf32>
    %cst_76 = arith.constant 5.000000e-01 : f32
    %510 = vector.broadcast %cst_76 : f32 to vector<2x128xf32>
    %511 = arith.mulf %510, %509 : vector<2x128xf32>
    %512 = math.tanh %511 : vector<2x128xf32>
    %cst_77 = arith.constant 5.000000e-01 : f32
    %513 = vector.broadcast %cst_77 : f32 to vector<2x128xf32>
    %514 = arith.mulf %513, %512 : vector<2x128xf32>
    %cst_78 = arith.constant 5.000000e-01 : f32
    %515 = vector.broadcast %cst_78 : f32 to vector<2x128xf32>
    %516 = arith.addf %514, %515 : vector<2x128xf32>
    %517 = arith.index_cast %c25_i32 : i32 to index
    %518 = memref.load %arg4[%517] : memref<32xf32, #tpu.memory_space<smem>>
    %519 = vector.broadcast %518 : f32 to vector<2x128xf32>
    %520 = arith.mulf %519, %516 : vector<2x128xf32>
    %521 = arith.addf %501, %520 : vector<2x128xf32>
    %c26_i32 = arith.constant 26 : i32
    %522 = arith.index_cast %c26_i32 : i32 to index
    %523 = memref.load %arg2[%522] : memref<32xf32, #tpu.memory_space<smem>>
    %524 = vector.broadcast %523 : f32 to vector<2x128xf32>
    %525 = arith.mulf %524, %0 : vector<2x128xf32>
    %526 = arith.index_cast %c26_i32 : i32 to index
    %527 = memref.load %arg3[%526] : memref<32xf32, #tpu.memory_space<smem>>
    %528 = vector.broadcast %527 : f32 to vector<2x128xf32>
    %529 = arith.addf %525, %528 : vector<2x128xf32>
    %cst_79 = arith.constant 5.000000e-01 : f32
    %530 = vector.broadcast %cst_79 : f32 to vector<2x128xf32>
    %531 = arith.mulf %530, %529 : vector<2x128xf32>
    %532 = math.tanh %531 : vector<2x128xf32>
    %cst_80 = arith.constant 5.000000e-01 : f32
    %533 = vector.broadcast %cst_80 : f32 to vector<2x128xf32>
    %534 = arith.mulf %533, %532 : vector<2x128xf32>
    %cst_81 = arith.constant 5.000000e-01 : f32
    %535 = vector.broadcast %cst_81 : f32 to vector<2x128xf32>
    %536 = arith.addf %534, %535 : vector<2x128xf32>
    %537 = arith.index_cast %c26_i32 : i32 to index
    %538 = memref.load %arg4[%537] : memref<32xf32, #tpu.memory_space<smem>>
    %539 = vector.broadcast %538 : f32 to vector<2x128xf32>
    %540 = arith.mulf %539, %536 : vector<2x128xf32>
    %541 = arith.addf %521, %540 : vector<2x128xf32>
    %c27_i32 = arith.constant 27 : i32
    %542 = arith.index_cast %c27_i32 : i32 to index
    %543 = memref.load %arg2[%542] : memref<32xf32, #tpu.memory_space<smem>>
    %544 = vector.broadcast %543 : f32 to vector<2x128xf32>
    %545 = arith.mulf %544, %0 : vector<2x128xf32>
    %546 = arith.index_cast %c27_i32 : i32 to index
    %547 = memref.load %arg3[%546] : memref<32xf32, #tpu.memory_space<smem>>
    %548 = vector.broadcast %547 : f32 to vector<2x128xf32>
    %549 = arith.addf %545, %548 : vector<2x128xf32>
    %cst_82 = arith.constant 5.000000e-01 : f32
    %550 = vector.broadcast %cst_82 : f32 to vector<2x128xf32>
    %551 = arith.mulf %550, %549 : vector<2x128xf32>
    %552 = math.tanh %551 : vector<2x128xf32>
    %cst_83 = arith.constant 5.000000e-01 : f32
    %553 = vector.broadcast %cst_83 : f32 to vector<2x128xf32>
    %554 = arith.mulf %553, %552 : vector<2x128xf32>
    %cst_84 = arith.constant 5.000000e-01 : f32
    %555 = vector.broadcast %cst_84 : f32 to vector<2x128xf32>
    %556 = arith.addf %554, %555 : vector<2x128xf32>
    %557 = arith.index_cast %c27_i32 : i32 to index
    %558 = memref.load %arg4[%557] : memref<32xf32, #tpu.memory_space<smem>>
    %559 = vector.broadcast %558 : f32 to vector<2x128xf32>
    %560 = arith.mulf %559, %556 : vector<2x128xf32>
    %561 = arith.addf %541, %560 : vector<2x128xf32>
    %c28_i32 = arith.constant 28 : i32
    %562 = arith.index_cast %c28_i32 : i32 to index
    %563 = memref.load %arg2[%562] : memref<32xf32, #tpu.memory_space<smem>>
    %564 = vector.broadcast %563 : f32 to vector<2x128xf32>
    %565 = arith.mulf %564, %0 : vector<2x128xf32>
    %566 = arith.index_cast %c28_i32 : i32 to index
    %567 = memref.load %arg3[%566] : memref<32xf32, #tpu.memory_space<smem>>
    %568 = vector.broadcast %567 : f32 to vector<2x128xf32>
    %569 = arith.addf %565, %568 : vector<2x128xf32>
    %cst_85 = arith.constant 5.000000e-01 : f32
    %570 = vector.broadcast %cst_85 : f32 to vector<2x128xf32>
    %571 = arith.mulf %570, %569 : vector<2x128xf32>
    %572 = math.tanh %571 : vector<2x128xf32>
    %cst_86 = arith.constant 5.000000e-01 : f32
    %573 = vector.broadcast %cst_86 : f32 to vector<2x128xf32>
    %574 = arith.mulf %573, %572 : vector<2x128xf32>
    %cst_87 = arith.constant 5.000000e-01 : f32
    %575 = vector.broadcast %cst_87 : f32 to vector<2x128xf32>
    %576 = arith.addf %574, %575 : vector<2x128xf32>
    %577 = arith.index_cast %c28_i32 : i32 to index
    %578 = memref.load %arg4[%577] : memref<32xf32, #tpu.memory_space<smem>>
    %579 = vector.broadcast %578 : f32 to vector<2x128xf32>
    %580 = arith.mulf %579, %576 : vector<2x128xf32>
    %581 = arith.addf %561, %580 : vector<2x128xf32>
    %c29_i32 = arith.constant 29 : i32
    %582 = arith.index_cast %c29_i32 : i32 to index
    %583 = memref.load %arg2[%582] : memref<32xf32, #tpu.memory_space<smem>>
    %584 = vector.broadcast %583 : f32 to vector<2x128xf32>
    %585 = arith.mulf %584, %0 : vector<2x128xf32>
    %586 = arith.index_cast %c29_i32 : i32 to index
    %587 = memref.load %arg3[%586] : memref<32xf32, #tpu.memory_space<smem>>
    %588 = vector.broadcast %587 : f32 to vector<2x128xf32>
    %589 = arith.addf %585, %588 : vector<2x128xf32>
    %cst_88 = arith.constant 5.000000e-01 : f32
    %590 = vector.broadcast %cst_88 : f32 to vector<2x128xf32>
    %591 = arith.mulf %590, %589 : vector<2x128xf32>
    %592 = math.tanh %591 : vector<2x128xf32>
    %cst_89 = arith.constant 5.000000e-01 : f32
    %593 = vector.broadcast %cst_89 : f32 to vector<2x128xf32>
    %594 = arith.mulf %593, %592 : vector<2x128xf32>
    %cst_90 = arith.constant 5.000000e-01 : f32
    %595 = vector.broadcast %cst_90 : f32 to vector<2x128xf32>
    %596 = arith.addf %594, %595 : vector<2x128xf32>
    %597 = arith.index_cast %c29_i32 : i32 to index
    %598 = memref.load %arg4[%597] : memref<32xf32, #tpu.memory_space<smem>>
    %599 = vector.broadcast %598 : f32 to vector<2x128xf32>
    %600 = arith.mulf %599, %596 : vector<2x128xf32>
    %601 = arith.addf %581, %600 : vector<2x128xf32>
    %c30_i32 = arith.constant 30 : i32
    %602 = arith.index_cast %c30_i32 : i32 to index
    %603 = memref.load %arg2[%602] : memref<32xf32, #tpu.memory_space<smem>>
    %604 = vector.broadcast %603 : f32 to vector<2x128xf32>
    %605 = arith.mulf %604, %0 : vector<2x128xf32>
    %606 = arith.index_cast %c30_i32 : i32 to index
    %607 = memref.load %arg3[%606] : memref<32xf32, #tpu.memory_space<smem>>
    %608 = vector.broadcast %607 : f32 to vector<2x128xf32>
    %609 = arith.addf %605, %608 : vector<2x128xf32>
    %cst_91 = arith.constant 5.000000e-01 : f32
    %610 = vector.broadcast %cst_91 : f32 to vector<2x128xf32>
    %611 = arith.mulf %610, %609 : vector<2x128xf32>
    %612 = math.tanh %611 : vector<2x128xf32>
    %cst_92 = arith.constant 5.000000e-01 : f32
    %613 = vector.broadcast %cst_92 : f32 to vector<2x128xf32>
    %614 = arith.mulf %613, %612 : vector<2x128xf32>
    %cst_93 = arith.constant 5.000000e-01 : f32
    %615 = vector.broadcast %cst_93 : f32 to vector<2x128xf32>
    %616 = arith.addf %614, %615 : vector<2x128xf32>
    %617 = arith.index_cast %c30_i32 : i32 to index
    %618 = memref.load %arg4[%617] : memref<32xf32, #tpu.memory_space<smem>>
    %619 = vector.broadcast %618 : f32 to vector<2x128xf32>
    %620 = arith.mulf %619, %616 : vector<2x128xf32>
    %621 = arith.addf %601, %620 : vector<2x128xf32>
    %c31_i32 = arith.constant 31 : i32
    %622 = arith.index_cast %c31_i32 : i32 to index
    %623 = memref.load %arg2[%622] : memref<32xf32, #tpu.memory_space<smem>>
    %624 = vector.broadcast %623 : f32 to vector<2x128xf32>
    %625 = arith.mulf %624, %0 : vector<2x128xf32>
    %626 = arith.index_cast %c31_i32 : i32 to index
    %627 = memref.load %arg3[%626] : memref<32xf32, #tpu.memory_space<smem>>
    %628 = vector.broadcast %627 : f32 to vector<2x128xf32>
    %629 = arith.addf %625, %628 : vector<2x128xf32>
    %cst_94 = arith.constant 5.000000e-01 : f32
    %630 = vector.broadcast %cst_94 : f32 to vector<2x128xf32>
    %631 = arith.mulf %630, %629 : vector<2x128xf32>
    %632 = math.tanh %631 : vector<2x128xf32>
    %cst_95 = arith.constant 5.000000e-01 : f32
    %633 = vector.broadcast %cst_95 : f32 to vector<2x128xf32>
    %634 = arith.mulf %633, %632 : vector<2x128xf32>
    %cst_96 = arith.constant 5.000000e-01 : f32
    %635 = vector.broadcast %cst_96 : f32 to vector<2x128xf32>
    %636 = arith.addf %634, %635 : vector<2x128xf32>
    %637 = arith.index_cast %c31_i32 : i32 to index
    %638 = memref.load %arg4[%637] : memref<32xf32, #tpu.memory_space<smem>>
    %639 = vector.broadcast %638 : f32 to vector<2x128xf32>
    %640 = arith.mulf %639, %636 : vector<2x128xf32>
    %641 = arith.addf %621, %640 : vector<2x128xf32>
    %c32_i32 = arith.constant 32 : i32
    %c0_97 = arith.constant 0 : index
    %642 = memref.load %arg5[%c0_97] : memref<1xf32, #tpu.memory_space<smem>>
    %643 = vector.broadcast %642 : f32 to vector<2x128xf32>
    %644 = arith.addf %641, %643 : vector<2x128xf32>
    %c0_98 = arith.constant 0 : index
    %c0_99 = arith.constant 0 : index
    %645 = vector.load %arg6[%c0_98, %c0_99] : memref<2x128xf32, #tpu.memory_space<vmem>>, vector<2x128xf32>
    tpu.vector_store %arg6[%c0_98, %c0_99], %644 {strides = array<i32>} : memref<2x128xf32, #tpu.memory_space<vmem>>, vector<2x128xf32>,
    return
  }
  func.func @transform_0(%arg0: i32) -> (i32, i32) {
    %c0_i32 = arith.constant 0 : i32
    %c0_i32_0 = arith.constant 0 : i32
    return %arg0, %c0_i32 : i32, i32
  }
  func.func @transform_1(%arg0: i32) -> i32 {
    %c0_i32 = arith.constant 0 : i32
    %c0_i32_0 = arith.constant 0 : i32
    return %c0_i32 : i32
  }
  func.func @transform_2(%arg0: i32) -> i32 {
    %c0_i32 = arith.constant 0 : i32
    %c0_i32_0 = arith.constant 0 : i32
    return %c0_i32 : i32
  }
  func.func @transform_3(%arg0: i32) -> i32 {
    %c0_i32 = arith.constant 0 : i32
    %c0_i32_0 = arith.constant 0 : i32
    return %c0_i32 : i32
  }
  func.func @transform_4(%arg0: i32) -> i32 {
    %c0_i32 = arith.constant 0 : i32
    %c0_i32_0 = arith.constant 0 : i32
    return %c0_i32 : i32
  }
  func.func @transform_5(%arg0: i32) -> (i32, i32) {
    %c0_i32 = arith.constant 0 : i32
    %c0_i32_0 = arith.constant 0 : i32
    return %arg0, %c0_i32 : i32, i32
  }
}

</mosaic_0001>

<llo_original>
// kernel: tpu_custom_call.1
$region0: #{tpu_custom_call.1}
  #allocation0 [shape = 'u32[]', space=smem, size = 0x4, offset = 0x4, fixed_abs, tag = 'smem constant byte address 0x4 - core index']
  #allocation1 [shape = 'u32[144,128]{1,0:T(1,128)}', space=vmem, size = 0x12000, scoped, tag = 'internal scratch']
  #allocation2 [shape = 'f32[1]{0:T(128)S(6)}', space=smem, size = 0x200, scoped, tag = 'scoped memory for tpu_custom_call.1']
  %s0 = inlined_call_operand.vmem [shape: f32[2,128], index: 0, kind: input, shape index: {}]
  %s1 = inlined_call_operand.vmem [shape: f32[32], index: 1, kind: input, shape index: {}]
  %s2 = inlined_call_operand.vmem [shape: f32[32], index: 2, kind: input, shape index: {}]
  %s3 = inlined_call_operand.vmem [shape: f32[32], index: 3, kind: input, shape index: {}]
  %s4 = inlined_call_operand.<no memory space> [shape: f32[1], index: 4, kind: input, shape index: {}]
  %s5 = inlined_call_operand.hbm [shape: f32[2,128], index: 5, kind: output, shape index: {}]
  %s6 = sld [smem:[#allocation0]]
  $region42: #{tpu_custom_call.1} parent=0
    _
  %s8 = ssub.s32 1, %s6
  %s9 = scalar_select 0, %s8, %s6
  %10 = sst [smem:[#allocation2]] %s4
  $region1: #{tpu_custom_call.1} parent=0
    #allocation3 [shape = 'u8[512]{0}', space=smem, size = 0x200, scoped, tag = 'input window, operand 1, single buffered']
    #allocation4 [shape = 's32[1]{0}', space=sflag, size = 0x4, scoped, tag = 'scoped memory for tpu_custom_call.1']
    #allocation5 [shape = 's32[1]{0}', space=sflag, size = 0x4, scoped, tag = 'scoped memory for tpu_custom_call.1']
    #allocation6 [shape = 'u8[512]{0}', space=smem, size = 0x200, scoped, tag = 'input window, operand 2, single buffered']
    #allocation7 [shape = 's32[1]{0}', space=sflag, size = 0x4, scoped, tag = 'scoped memory for tpu_custom_call.1']
    #allocation8 [shape = 'u8[512]{0}', space=smem, size = 0x200, scoped, tag = 'input window, operand 3, single buffered']
    #allocation9 [shape = 'u8[1024]{0}', space=vmem, size = 0x400, scoped, tag = 'output window, operand 0, single buffered']
    %11 = vsyncpa [#allocation5], 0
    %12 = vsyncpa [#allocation7], 0
    %13 = vsyncpa [#allocation4], 0
    // Predicated region
    $region2: #{tpu_custom_call.1} parent=1 // pred_check
      _
    $region3: #{tpu_custom_call.1} parent=1 // pred_check_branch
      %15 = sbr.rel (0) target = $region5
    $region4: #{tpu_custom_call.1} parent=1 // pred_region
      _
    $region5: #{tpu_custom_call.1} parent=1 // pred_fallthru
      _
    // Predicated region
    $region6: #{tpu_custom_call.1} parent=1 // pred_check
      _
    $region7: #{tpu_custom_call.1} parent=1 // pred_check_branch
      %17 = sbr.rel (0) target = $region9
    $region8: #{tpu_custom_call.1} parent=1 // pred_region
      %s19 = ssub.s32 16, 16
      %20 = vsyncadd [#allocation5], %s19
      %s22 = sshll.u32 %s1, 4
      %s23 = int_to_ptr.vmem [resolvable:$true] %s22
      %25 = dma.vmem_to_smem %s23, 16, [#allocation3], [#allocation5]
    $region9: #{tpu_custom_call.1} parent=1 // pred_fallthru
      _
    // Predicated region
    $region10: #{tpu_custom_call.1} parent=1 // pred_check
      _
    $region11: #{tpu_custom_call.1} parent=1 // pred_check_branch
      %27 = sbr.rel (0) target = $region13
    $region12: #{tpu_custom_call.1} parent=1 // pred_region
      %s29 = ssub.s32 16, 16
      %30 = vsyncadd [#allocation7], %s29
      %s32 = sshll.u32 %s2, 4
      %s33 = int_to_ptr.vmem [resolvable:$true] %s32
      %35 = dma.vmem_to_smem %s33, 16, [#allocation6], [#allocation7]
    $region13: #{tpu_custom_call.1} parent=1 // pred_fallthru
      _
    // Predicated region
    $region14: #{tpu_custom_call.1} parent=1 // pred_check
      _
    $region15: #{tpu_custom_call.1} parent=1 // pred_check_branch
      %37 = sbr.rel (0) target = $region17
    $region16: #{tpu_custom_call.1} parent=1 // pred_region
      %s39 = ssub.s32 16, 16
      %40 = vsyncadd [#allocation7], %s39
      %s42 = sshll.u32 %s3, 4
      %s43 = int_to_ptr.vmem [resolvable:$true] %s42
      %45 = dma.vmem_to_smem %s43, 16, [#allocation8], [#allocation7]
    $region17: #{tpu_custom_call.1} parent=1 // pred_fallthru
      _
    // Predicated region
    $region18: #{tpu_custom_call.1} parent=1 // pred_check
      _
    $region19: #{tpu_custom_call.1} parent=1 // pred_check_branch
      %47 = sbr.rel (0) target = $region21
    $region20: #{tpu_custom_call.1} parent=1 // pred_region
      _
    $region21: #{tpu_custom_call.1} parent=1 // pred_fallthru
      _
    // Predicated region
    $region22: #{tpu_custom_call.1} parent=1 // pred_check
      _
    $region23: #{tpu_custom_call.1} parent=1 // pred_check_branch
      %49 = sbr.rel (0) target = $region25
    $region24: #{tpu_custom_call.1} parent=1 // pred_region
      %50 = dma.done [#allocation5], 16
    $region25: #{tpu_custom_call.1} parent=1 // pred_fallthru
      _
    // Predicated region
    $region26: #{tpu_custom_call.1} parent=1 // pred_check
      _
    $region27: #{tpu_custom_call.1} parent=1 // pred_check_branch
      %52 = sbr.rel (0) target = $region29
    $region28: #{tpu_custom_call.1} parent=1 // pred_region
      %53 = dma.done [#allocation7], 16
    $region29: #{tpu_custom_call.1} parent=1 // pred_fallthru
      _
    // Predicated region
    $region30: #{tpu_custom_call.1} parent=1 // pred_check
      _
    $region31: #{tpu_custom_call.1} parent=1 // pred_check_branch
      %55 = sbr.rel (0) target = $region33
    $region32: #{tpu_custom_call.1} parent=1 // pred_region
      %56 = dma.done [#allocation7], 16
    $region33: #{tpu_custom_call.1} parent=1 // pred_fallthru
      _
    %57 = sfence
    %v58 = vld [vmem:[%s0] sm:$0x3]
    %s59 = sld [smem:[#allocation3]]
    %v60 = vstv %s59
    %v61 = vmul.f32 %v60, %v58
    %s62 = sld [smem:[#allocation6]]
    %v63 = vstv %s62
    %v64 = vadd.f32 %v61, %v63
    %v65 = vmul.f32 %v64, 0.5
    %v66 = vtanh.pop %v65
    %v67 = vmul.f32 %v66, 0.5
    %v68 = vadd.f32 %v67, 0.5
    %s69 = sld [smem:[#allocation8]]
    %v70 = vstv %s69
    %v71 = vmul.f32 %v70, %v68
    %v72 = vadd.f32 %v71, 0.0
    %s73 = sld [smem:[#allocation3 + $0x1]]
    %v74 = vstv %s73
    %v75 = vmul.f32 %v74, %v58
    %s76 = sld [smem:[#allocation6 + $0x1]]
    %v77 = vstv %s76
    %v78 = vadd.f32 %v75, %v77
    %v79 = vmul.f32 %v78, 0.5
    %v80 = vtanh.pop %v79
    %v81 = vmul.f32 %v80, 0.5
    %v82 = vadd.f32 %v81, 0.5
    %s83 = sld [smem:[#allocation8 + $0x1]]
    %v84 = vstv %s83
    %v85 = vmul.f32 %v84, %v82
    %v86 = vadd.f32 %v72, %v85
    %s87 = sld [smem:[#allocation3 + $0x2]]
    %v88 = vstv %s87
    %v89 = vmul.f32 %v88, %v58
    %s90 = sld [smem:[#allocation6 + $0x2]]
    %v91 = vstv %s90
    %v92 = vadd.f32 %v89, %v91
    %v93 = vmul.f32 %v92, 0.5
    %v94 = vtanh.pop %v93
    %v95 = vmul.f32 %v94, 0.5
    %v96 = vadd.f32 %v95, 0.5
    %s97 = sld [smem:[#allocation8 + $0x2]]
    %v98 = vstv %s97
    %v99 = vmul.f32 %v98, %v96
    %v100 = vadd.f32 %v86, %v99
    %s101 = sld [smem:[#allocation3 + $0x3]]
    %v102 = vstv %s101
    %v103 = vmul.f32 %v102, %v58
    %s104 = sld [smem:[#allocation6 + $0x3]]
    %v105 = vstv %s104
    %v106 = vadd.f32 %v103, %v105
    %v107 = vmul.f32 %v106, 0.5
    %v108 = vtanh.pop %v107
    %v109 = vmul.f32 %v108, 0.5
    %v110 = vadd.f32 %v109, 0.5
    %s111 = sld [smem:[#allocation8 + $0x3]]
    %v112 = vstv %s111
    %v113 = vmul.f32 %v112, %v110
    %v114 = vadd.f32 %v100, %v113
    %s115 = sld [smem:[#allocation3 + $0x4]]
    %v116 = vstv %s115
    %v117 = vmul.f32 %v116, %v58
    %s118 = sld [smem:[#allocation6 + $0x4]]
    %v119 = vstv %s118
    %v120 = vadd.f32 %v117, %v119
    %v121 = vmul.f32 %v120, 0.5
    %v122 = vtanh.pop %v121
    %v123 = vmul.f32 %v122, 0.5
    %v124 = vadd.f32 %v123, 0.5
    %s125 = sld [smem:[#allocation8 + $0x4]]
    %v126 = vstv %s125
    %v127 = vmul.f32 %v126, %v124
    %v128 = vadd.f32 %v114, %v127
    %s129 = sld [smem:[#allocation3 + $0x5]]
    %v130 = vstv %s129
    %v131 = vmul.f32 %v130, %v58
    %s132 = sld [smem:[#allocation6 + $0x5]]
    %v133 = vstv %s132
    %v134 = vadd.f32 %v131, %v133
    %v135 = vmul.f32 %v134, 0.5
    %v136 = vtanh.pop %v135
    %v137 = vmul.f32 %v136, 0.5
    %v138 = vadd.f32 %v137, 0.5
    %s139 = sld [smem:[#allocation8 + $0x5]]
    %v140 = vstv %s139
    %v141 = vmul.f32 %v140, %v138
    %v142 = vadd.f32 %v128, %v141
    %s143 = sld [smem:[#allocation3 + $0x6]]
    %v144 = vstv %s143
    %v145 = vmul.f32 %v144, %v58
    %s146 = sld [smem:[#allocation6 + $0x6]]
    %v147 = vstv %s146
    %v148 = vadd.f32 %v145, %v147
    %v149 = vmul.f32 %v148, 0.5
    %v150 = vtanh.pop %v149
    %v151 = vmul.f32 %v150, 0.5
    %v152 = vadd.f32 %v151, 0.5
    %s153 = sld [smem:[#allocation8 + $0x6]]
    %v154 = vstv %s153
    %v155 = vmul.f32 %v154, %v152
    %v156 = vadd.f32 %v142, %v155
    %s157 = sld [smem:[#allocation3 + $0x7]]
    %v158 = vstv %s157
    %v159 = vmul.f32 %v158, %v58
    %s160 = sld [smem:[#allocation6 + $0x7]]
    %v161 = vstv %s160
    %v162 = vadd.f32 %v159, %v161
    %v163 = vmul.f32 %v162, 0.5
    %v164 = vtanh.pop %v163
    %v165 = vmul.f32 %v164, 0.5
    %v166 = vadd.f32 %v165, 0.5
    %s167 = sld [smem:[#allocation8 + $0x7]]
    %v168 = vstv %s167
    %v169 = vmul.f32 %v168, %v166
    %v170 = vadd.f32 %v156, %v169
    %s171 = sld [smem:[#allocation3 + $0x8]]
    %v172 = vstv %s171
    %v173 = vmul.f32 %v172, %v58
    %s174 = sld [smem:[#allocation6 + $0x8]]
    %v175 = vstv %s174
    %v176 = vadd.f32 %v173, %v175
    %v177 = vmul.f32 %v176, 0.5
    %v178 = vtanh.pop %v177
    %v179 = vmul.f32 %v178, 0.5
    %v180 = vadd.f32 %v179, 0.5
    %s181 = sld [smem:[#allocation8 + $0x8]]
    %v182 = vstv %s181
    %v183 = vmul.f32 %v182, %v180
    %v184 = vadd.f32 %v170, %v183
    %s185 = sld [smem:[#allocation3 + $0x9]]
    %v186 = vstv %s185
    %v187 = vmul.f32 %v186, %v58
    %s188 = sld [smem:[#allocation6 + $0x9]]
    %v189 = vstv %s188
    %v190 = vadd.f32 %v187, %v189
    %v191 = vmul.f32 %v190, 0.5
    %v192 = vtanh.pop %v191
    %v193 = vmul.f32 %v192, 0.5
    %v194 = vadd.f32 %v193, 0.5
    %s195 = sld [smem:[#allocation8 + $0x9]]
    %v196 = vstv %s195
    %v197 = vmul.f32 %v196, %v194
    %v198 = vadd.f32 %v184, %v197
    %s199 = sld [smem:[#allocation3 + $0xa]]
    %v200 = vstv %s199
    %v201 = vmul.f32 %v200, %v58
    %s202 = sld [smem:[#allocation6 + $0xa]]
    %v203 = vstv %s202
    %v204 = vadd.f32 %v201, %v203
    %v205 = vmul.f32 %v204, 0.5
    %v206 = vtanh.pop %v205
    %v207 = vmul.f32 %v206, 0.5
    %v208 = vadd.f32 %v207, 0.5
    %s209 = sld [smem:[#allocation8 + $0xa]]
    %v210 = vstv %s209
    %v211 = vmul.f32 %v210, %v208
    %v212 = vadd.f32 %v198, %v211
    %s213 = sld [smem:[#allocation3 + $0xb]]
    %v214 = vstv %s213
    %v215 = vmul.f32 %v214, %v58
    %s216 = sld [smem:[#allocation6 + $0xb]]
    %v217 = vstv %s216
    %v218 = vadd.f32 %v215, %v217
    %v219 = vmul.f32 %v218, 0.5
    %v220 = vtanh.pop %v219
    %v221 = vmul.f32 %v220, 0.5
    %v222 = vadd.f32 %v221, 0.5
    %s223 = sld [smem:[#allocation8 + $0xb]]
    %v224 = vstv %s223
    %v225 = vmul.f32 %v224, %v222
    %v226 = vadd.f32 %v212, %v225
    %s227 = sld [smem:[#allocation3 + $0xc]]
    %v228 = vstv %s227
    %v229 = vmul.f32 %v228, %v58
    %s230 = sld [smem:[#allocation6 + $0xc]]
    %v231 = vstv %s230
    %v232 = vadd.f32 %v229, %v231
    %v233 = vmul.f32 %v232, 0.5
    %v234 = vtanh.pop %v233
    %v235 = vmul.f32 %v234, 0.5
    %v236 = vadd.f32 %v235, 0.5
    %s237 = sld [smem:[#allocation8 + $0xc]]
    %v238 = vstv %s237
    %v239 = vmul.f32 %v238, %v236
    %v240 = vadd.f32 %v226, %v239
    %s241 = sld [smem:[#allocation3 + $0xd]]
    %v242 = vstv %s241
    %v243 = vmul.f32 %v242, %v58
    %s244 = sld [smem:[#allocation6 + $0xd]]
    %v245 = vstv %s244
    %v246 = vadd.f32 %v243, %v245
    %v247 = vmul.f32 %v246, 0.5
    %v248 = vtanh.pop %v247
    %v249 = vmul.f32 %v248, 0.5
    %v250 = vadd.f32 %v249, 0.5
    %s251 = sld [smem:[#allocation8 + $0xd]]
    %v252 = vstv %s251
    %v253 = vmul.f32 %v252, %v250
    %v254 = vadd.f32 %v240, %v253
    %s255 = sld [smem:[#allocation3 + $0xe]]
    %v256 = vstv %s255
    %v257 = vmul.f32 %v256, %v58
    %s258 = sld [smem:[#allocation6 + $0xe]]
    %v259 = vstv %s258
    %v260 = vadd.f32 %v257, %v259
    %v261 = vmul.f32 %v260, 0.5
    %v262 = vtanh.pop %v261
    %v263 = vmul.f32 %v262, 0.5
    %v264 = vadd.f32 %v263, 0.5
    %s265 = sld [smem:[#allocation8 + $0xe]]
    %v266 = vstv %s265
    %v267 = vmul.f32 %v266, %v264
    %v268 = vadd.f32 %v254, %v267
    %s269 = sld [smem:[#allocation3 + $0xf]]
    %v270 = vstv %s269
    %v271 = vmul.f32 %v270, %v58
    %s272 = sld [smem:[#allocation6 + $0xf]]
    %v273 = vstv %s272
    %v274 = vadd.f32 %v271, %v273
    %v275 = vmul.f32 %v274, 0.5
    %v276 = vtanh.pop %v275
    %v277 = vmul.f32 %v276, 0.5
    %v278 = vadd.f32 %v277, 0.5
    %s279 = sld [smem:[#allocation8 + $0xf]]
    %v280 = vstv %s279
    %v281 = vmul.f32 %v280, %v278
    %v282 = vadd.f32 %v268, %v281
    %s283 = sld [smem:[#allocation3 + $0x10]]
    %v284 = vstv %s283
    %v285 = vmul.f32 %v284, %v58
    %s286 = sld [smem:[#allocation6 + $0x10]]
    %v287 = vstv %s286
    %v288 = vadd.f32 %v285, %v287
    %v289 = vmul.f32 %v288, 0.5
    %v290 = vtanh.pop %v289
    %v291 = vmul.f32 %v290, 0.5
    %v292 = vadd.f32 %v291, 0.5
    %s293 = sld [smem:[#allocation8 + $0x10]]
    %v294 = vstv %s293
    %v295 = vmul.f32 %v294, %v292
    %v296 = vadd.f32 %v282, %v295
    %s297 = sld [smem:[#allocation3 + $0x11]]
    %v298 = vstv %s297
    %v299 = vmul.f32 %v298, %v58
    %s300 = sld [smem:[#allocation6 + $0x11]]
    %v301 = vstv %s300
    %v302 = vadd.f32 %v299, %v301
    %v303 = vmul.f32 %v302, 0.5
    %v304 = vtanh.pop %v303
    %v305 = vmul.f32 %v304, 0.5
    %v306 = vadd.f32 %v305, 0.5
    %s307 = sld [smem:[#allocation8 + $0x11]]
    %v308 = vstv %s307
    %v309 = vmul.f32 %v308, %v306
    %v310 = vadd.f32 %v296, %v309
    %s311 = sld [smem:[#allocation3 + $0x12]]
    %v312 = vstv %s311
    %v313 = vmul.f32 %v312, %v58
    %s314 = sld [smem:[#allocation6 + $0x12]]
    %v315 = vstv %s314
    %v316 = vadd.f32 %v313, %v315
    %v317 = vmul.f32 %v316, 0.5
    %v318 = vtanh.pop %v317
    %v319 = vmul.f32 %v318, 0.5
    %v320 = vadd.f32 %v319, 0.5
    %s321 = sld [smem:[#allocation8 + $0x12]]
    %v322 = vstv %s321
    %v323 = vmul.f32 %v322, %v320
    %v324 = vadd.f32 %v310, %v323
    %s325 = sld [smem:[#allocation3 + $0x13]]
    %v326 = vstv %s325
    %v327 = vmul.f32 %v326, %v58
    %s328 = sld [smem:[#allocation6 + $0x13]]
    %v329 = vstv %s328
    %v330 = vadd.f32 %v327, %v329
    %v331 = vmul.f32 %v330, 0.5
    %v332 = vtanh.pop %v331
    %v333 = vmul.f32 %v332, 0.5
    %v334 = vadd.f32 %v333, 0.5
    %s335 = sld [smem:[#allocation8 + $0x13]]
    %v336 = vstv %s335
    %v337 = vmul.f32 %v336, %v334
    %v338 = vadd.f32 %v324, %v337
    %s339 = sld [smem:[#allocation3 + $0x14]]
    %v340 = vstv %s339
    %v341 = vmul.f32 %v340, %v58
    %s342 = sld [smem:[#allocation6 + $0x14]]
    %v343 = vstv %s342
    %v344 = vadd.f32 %v341, %v343
    %v345 = vmul.f32 %v344, 0.5
    %v346 = vtanh.pop %v345
    %v347 = vmul.f32 %v346, 0.5
    %v348 = vadd.f32 %v347, 0.5
    %s349 = sld [smem:[#allocation8 + $0x14]]
    %v350 = vstv %s349
    %v351 = vmul.f32 %v350, %v348
    %v352 = vadd.f32 %v338, %v351
    %s353 = sld [smem:[#allocation3 + $0x15]]
    %v354 = vstv %s353
    %v355 = vmul.f32 %v354, %v58
    %s356 = sld [smem:[#allocation6 + $0x15]]
    %v357 = vstv %s356
    %v358 = vadd.f32 %v355, %v357
    %v359 = vmul.f32 %v358, 0.5
    %v360 = vtanh.pop %v359
    %v361 = vmul.f32 %v360, 0.5
    %v362 = vadd.f32 %v361, 0.5
    %s363 = sld [smem:[#allocation8 + $0x15]]
    %v364 = vstv %s363
    %v365 = vmul.f32 %v364, %v362
    %v366 = vadd.f32 %v352, %v365
    %s367 = sld [smem:[#allocation3 + $0x16]]
    %v368 = vstv %s367
    %v369 = vmul.f32 %v368, %v58
    %s370 = sld [smem:[#allocation6 + $0x16]]
    %v371 = vstv %s370
    %v372 = vadd.f32 %v369, %v371
    %v373 = vmul.f32 %v372, 0.5
    %v374 = vtanh.pop %v373
    %v375 = vmul.f32 %v374, 0.5
    %v376 = vadd.f32 %v375, 0.5
    %s377 = sld [smem:[#allocation8 + $0x16]]
    %v378 = vstv %s377
    %v379 = vmul.f32 %v378, %v376
    %v380 = vadd.f32 %v366, %v379
    %s381 = sld [smem:[#allocation3 + $0x17]]
    %v382 = vstv %s381
    %v383 = vmul.f32 %v382, %v58
    %s384 = sld [smem:[#allocation6 + $0x17]]
    %v385 = vstv %s384
    %v386 = vadd.f32 %v383, %v385
    %v387 = vmul.f32 %v386, 0.5
    %v388 = vtanh.pop %v387
    %v389 = vmul.f32 %v388, 0.5
    %v390 = vadd.f32 %v389, 0.5
    %s391 = sld [smem:[#allocation8 + $0x17]]
    %v392 = vstv %s391
    %v393 = vmul.f32 %v392, %v390
    %v394 = vadd.f32 %v380, %v393
    %s395 = sld [smem:[#allocation3 + $0x18]]
    %v396 = vstv %s395
    %v397 = vmul.f32 %v396, %v58
    %s398 = sld [smem:[#allocation6 + $0x18]]
    %v399 = vstv %s398
    %v400 = vadd.f32 %v397, %v399
    %v401 = vmul.f32 %v400, 0.5
    %v402 = vtanh.pop %v401
    %v403 = vmul.f32 %v402, 0.5
    %v404 = vadd.f32 %v403, 0.5
    %s405 = sld [smem:[#allocation8 + $0x18]]
    %v406 = vstv %s405
    %v407 = vmul.f32 %v406, %v404
    %v408 = vadd.f32 %v394, %v407
    %s409 = sld [smem:[#allocation3 + $0x19]]
    %v410 = vstv %s409
    %v411 = vmul.f32 %v410, %v58
    %s412 = sld [smem:[#allocation6 + $0x19]]
    %v413 = vstv %s412
    %v414 = vadd.f32 %v411, %v413
    %v415 = vmul.f32 %v414, 0.5
    %v416 = vtanh.pop %v415
    %v417 = vmul.f32 %v416, 0.5
    %v418 = vadd.f32 %v417, 0.5
    %s419 = sld [smem:[#allocation8 + $0x19]]
    %v420 = vstv %s419
    %v421 = vmul.f32 %v420, %v418
    %v422 = vadd.f32 %v408, %v421
    %s423 = sld [smem:[#allocation3 + $0x1a]]
    %v424 = vstv %s423
    %v425 = vmul.f32 %v424, %v58
    %s426 = sld [smem:[#allocation6 + $0x1a]]
    %v427 = vstv %s426
    %v428 = vadd.f32 %v425, %v427
    %v429 = vmul.f32 %v428, 0.5
    %v430 = vtanh.pop %v429
    %v431 = vmul.f32 %v430, 0.5
    %v432 = vadd.f32 %v431, 0.5
    %s433 = sld [smem:[#allocation8 + $0x1a]]
    %v434 = vstv %s433
    %v435 = vmul.f32 %v434, %v432
    %v436 = vadd.f32 %v422, %v435
    %s437 = sld [smem:[#allocation3 + $0x1b]]
    %v438 = vstv %s437
    %v439 = vmul.f32 %v438, %v58
    %s440 = sld [smem:[#allocation6 + $0x1b]]
    %v441 = vstv %s440
    %v442 = vadd.f32 %v439, %v441
    %v443 = vmul.f32 %v442, 0.5
    %v444 = vtanh.pop %v443
    %v445 = vmul.f32 %v444, 0.5
    %v446 = vadd.f32 %v445, 0.5
    %s447 = sld [smem:[#allocation8 + $0x1b]]
    %v448 = vstv %s447
    %v449 = vmul.f32 %v448, %v446
    %v450 = vadd.f32 %v436, %v449
    %s451 = sld [smem:[#allocation3 + $0x1c]]
    %v452 = vstv %s451
    %v453 = vmul.f32 %v452, %v58
    %s454 = sld [smem:[#allocation6 + $0x1c]]
    %v455 = vstv %s454
    %v456 = vadd.f32 %v453, %v455
    %v457 = vmul.f32 %v456, 0.5
    %v458 = vtanh.pop %v457
    %v459 = vmul.f32 %v458, 0.5
    %v460 = vadd.f32 %v459, 0.5
    %s461 = sld [smem:[#allocation8 + $0x1c]]
    %v462 = vstv %s461
    %v463 = vmul.f32 %v462, %v460
    %v464 = vadd.f32 %v450, %v463
    %s465 = sld [smem:[#allocation3 + $0x1d]]
    %v466 = vstv %s465
    %v467 = vmul.f32 %v466, %v58
    %s468 = sld [smem:[#allocation6 + $0x1d]]
    %v469 = vstv %s468
    %v470 = vadd.f32 %v467, %v469
    %v471 = vmul.f32 %v470, 0.5
    %v472 = vtanh.pop %v471
    %v473 = vmul.f32 %v472, 0.5
    %v474 = vadd.f32 %v473, 0.5
    %s475 = sld [smem:[#allocation8 + $0x1d]]
    %v476 = vstv %s475
    %v477 = vmul.f32 %v476, %v474
    %v478 = vadd.f32 %v464, %v477
    %s479 = sld [smem:[#allocation3 + $0x1e]]
    %v480 = vstv %s479
    %v481 = vmul.f32 %v480, %v58
    %s482 = sld [smem:[#allocation6 + $0x1e]]
    %v483 = vstv %s482
    %v484 = vadd.f32 %v481, %v483
    %v485 = vmul.f32 %v484, 0.5
    %v486 = vtanh.pop %v485
    %v487 = vmul.f32 %v486, 0.5
    %v488 = vadd.f32 %v487, 0.5
    %s489 = sld [smem:[#allocation8 + $0x1e]]
    %v490 = vstv %s489
    %v491 = vmul.f32 %v490, %v488
    %v492 = vadd.f32 %v478, %v491
    %s493 = sld [smem:[#allocation3 + $0x1f]]
    %v494 = vstv %s493
    %v495 = vmul.f32 %v494, %v58
    %s496 = sld [smem:[#allocation6 + $0x1f]]
    %v497 = vstv %s496
    %v498 = vadd.f32 %v495, %v497
    %v499 = vmul.f32 %v498, 0.5
    %v500 = vtanh.pop %v499
    %v501 = vmul.f32 %v500, 0.5
    %v502 = vadd.f32 %v501, 0.5
    %s503 = sld [smem:[#allocation8 + $0x1f]]
    %v504 = vstv %s503
    %v505 = vmul.f32 %v504, %v502
    %v506 = vadd.f32 %v492, %v505
    %s507 = sld [smem:[#allocation2]]
    %v508 = vstv %s507
    %v509 = vadd.f32 %v506, %v508
    %510 = vst [vmem:[#allocation9] sm:$0x3] %v509
    // Predicated region
    $region34: #{tpu_custom_call.1} parent=1 // pred_check
      _
    $region35: #{tpu_custom_call.1} parent=1 // pred_check_branch
      %512 = sbr.rel (0) target = $region37
    $region36: #{tpu_custom_call.1} parent=1 // pred_region
      %s514 = ssub.s32 32, 32
      %515 = vsyncadd [#allocation4], %s514
      %s517 = sshll.u32 [#allocation9], 4
      %s518 = int_to_ptr.vmem [resolvable:$true] %s517
      %520 = dma.vmem_to_hbm [thread:$0]  %s518, 32, %s5, [#allocation4]
    $region37: #{tpu_custom_call.1} parent=1 // pred_fallthru
      _
    // Predicated region
    $region38: #{tpu_custom_call.1} parent=1 // pred_check
      _
    $region39: #{tpu_custom_call.1} parent=1 // pred_check_branch
      %522 = sbr.rel (0) target = $region41
    $region40: #{tpu_custom_call.1} parent=1 // pred_region
      %523 = dma.done [#allocation4], 32
    $region41: #{tpu_custom_call.1} parent=1 // pred_fallthru
      _
    %524 = vsyncpa [#allocation4], 1
    %525 = vsyncpa [#allocation5], 1
    %526 = vsyncpa [#allocation7], 1

</llo_original>
